<compile_context>
chip_gen: v5e
topology: v5e:2x2
jax: 0.10.0
libtpu: 0.0.40
codegen_flags: <defaults>
</compile_context>

<pallas_src>
import functools

import jax
import jax.numpy as jnp
from jax.experimental import pallas as pl
from jax.experimental.pallas import tpu as pltpu

LANE = 128      # TPU lane width: hidden/output feature axes padded to this.
SUBLANE = 8     # sublane alignment for the layer-1 contraction dim.


def _round_up(n, m):
    return ((n + m - 1) // m) * m


# --------------------------------------------------------------------------
# Kernel: one batch tile, 5 fused matmuls (bf16 operands, f32 accumulation)
# + 4 ReLUs.  Bias add + ReLU ride the VPU while the MXU is busy.
# --------------------------------------------------------------------------
def mlp_kernel(x_ref, *refs):
    o_ref = refs[-1]
    wb_refs = refs[:-1]
    n_layers = len(wb_refs) // 2

    h = x_ref[...]                                        # bf16 [tb, in_p]
    for li in range(n_layers):
        w_ref = wb_refs[2 * li]
        b_ref = wb_refs[2 * li + 1]
        acc = jnp.dot(h, w_ref[...],
                      preferred_element_type=jnp.float32) + b_ref[...]
        if li < n_layers - 1:
            h = jnp.maximum(acc, 0.0).astype(jnp.bfloat16)
        else:
            h = acc                                       # final layer, f32 acc
    o_ref[...] = h.astype(o_ref.dtype)                    # bf16 lane-dense store


# --------------------------------------------------------------------------
# One-time parameter preparation (hoisted out of the forward call path).
# --------------------------------------------------------------------------
def prepare_params(params, input_size):
    """Pad + cast params once.  Returns a flat tuple:
       (w1p[bf16], b1p[f32], w2p, b2p, ...) with layer-1 input dim padded to a
       multiple of 8 and all other feature dims padded to multiples of 128."""
    sizes = [input_size] + [w.shape[1] for w, _ in params]
    feat_p = [_round_up(sizes[0], SUBLANE)] + [_round_up(s, LANE) for s in sizes[1:]]

    flat = []
    for (w, b), fi, fo in zip(params, feat_p[:-1], feat_p[1:]):
        wp = jnp.zeros((fi, fo), jnp.float32)
        wp = wp.at[:w.shape[0], :w.shape[1]].set(w).astype(jnp.bfloat16)
        bp = jnp.zeros((1, fo), jnp.float32).at[:, :b.shape[1]].set(b)
        flat.append(wp)
        flat.append(bp)
    return tuple(flat)


# --------------------------------------------------------------------------
# Forward pass.  `flat_params` are the pre-padded/cast arrays from
# prepare_params; only x is prepped (bf16 cast + tile pad) per call.
# --------------------------------------------------------------------------
@functools.partial(jax.jit, static_argnames=("out_features", "tile_b"))
def mlp_forward(x, flat_params, *, out_features, tile_b=2048):
    batch, in_features = x.shape
    n_layers = len(flat_params) // 2
    in_p = flat_params[0].shape[0]
    feat_p = [in_p] + [flat_params[2 * li].shape[1] for li in range(n_layers)]

    # Batch tile: 16-aligned (bf16 sublane packing), capped so the grid keeps
    # >= 2 steps whenever batch allows it (v7x megacore + DMA pipelining).
    tb = min(tile_b, max(16, _round_up(pl.cdiv(batch, 2), 16)))
    batch_p = _round_up(batch, tb)
    num_tiles = batch_p // tb

    # Input prep: cast to bf16 BEFORE padding (half the bytes of the copy),
    # pad feature only up to the 8-aligned width and batch up to the tile grid.
    xb = x.astype(jnp.bfloat16)
    xb = jnp.pad(xb, ((0, batch_p - batch), (0, in_p - in_features)))

    # Specs: activation tiles march over batch; weights/biases use constant
    # block indices -> fetched once, VMEM-resident across all grid steps.
    in_specs = [pl.BlockSpec((tb, in_p), lambda i: (i, 0))]
    for li in range(n_layers):
        fi, fo = feat_p[li], feat_p[li + 1]
        in_specs.append(pl.BlockSpec((fi, fo), lambda i: (0, 0)))
        in_specs.append(pl.BlockSpec((1, fo), lambda i: (0, 0)))
    out_spec = pl.BlockSpec((tb, feat_p[-1]), lambda i: (i, 0))

    # Cost hint: this now reflects the real padded HBM traffic / MXU work.
    flops = 2 * batch_p * sum(a * b for a, b in zip(feat_p[:-1], feat_p[1:]))
    bytes_accessed = (xb.size * 2
                      + sum(a.size * a.dtype.itemsize for a in flat_params)
                      + batch_p * feat_p[-1] * 2)

    out_padded = pl.pallas_call(
        mlp_kernel,
        out_shape=jax.ShapeDtypeStruct((batch_p, feat_p[-1]), jnp.bfloat16),
        grid=(num_tiles,),
        in_specs=in_specs,
        out_specs=out_spec,
        compiler_params=pltpu.CompilerParams(
            dimension_semantics=("parallel",),      # megacore split on v7x
            vmem_limit_bytes=32 * 1024 * 1024,      # safe on v5e/v6e/v7x
        ),
        cost_estimate=pl.CostEstimate(
            flops=flops, transcendentals=0, bytes_accessed=bytes_accessed),
    )(xb, *flat_params)

    return out_padded[:batch, :out_features].astype(jnp.float32)


# --------------------------------------------------------------------------
# Init + pure-JAX reference (mirrors kernel numerics: bf16 storage of
# activations/weights/output, f32 accumulation, f32 biases).
# --------------------------------------------------------------------------
def init_params(key, input_size, hidden_size, output_size):
    sizes = [input_size,
             hidden_size,
             hidden_size // 2,
             hidden_size // 4,
             hidden_size // 8,
             output_size]
    params = []
    for i in range(len(sizes) - 1):
        fan_in, fan_out = sizes[i], sizes[i + 1]
        key, kw, kb = jax.random.split(key, 3)
        bound = 1.0 / (fan_in ** 0.5)
        w = jax.random.uniform(kw, (fan_in, fan_out), jnp.float32, -bound, bound)
        b = jax.random.uniform(kb, (1, fan_out), jnp.float32, -bound, bound)
        params.append((w, b))
    return params


def reference_forward(x, params):
    h = x.astype(jnp.bfloat16).astype(jnp.float32)
    n = len(params)
    for i, (w, b) in enumerate(params):
        wq = w.astype(jnp.bfloat16).astype(jnp.float32)
        h = h @ wq + b
        if i < n - 1:
            h = jnp.maximum(h, 0.0).astype(jnp.bfloat16).astype(jnp.float32)
    return h.astype(jnp.bfloat16).astype(jnp.float32)   # kernel stores bf16


if __name__ == "__main__":
    input_size, hidden_size, output_size = 32, 64, 4
    batch = 8

    key = jax.random.PRNGKey(0)
    key, kx = jax.random.split(key)
    x = jax.random.normal(kx, (batch, input_size), jnp.float32)
    params = init_params(key, input_size, hidden_size, output_size)

    # One-time prep (padding + bf16 cast hoisted out of the forward path).
    flat_params = prepare_params(params, input_size)

    out = jax.block_until_ready(
        mlp_forward(x, flat_params, out_features=output_size))

    ref = reference_forward(x, params)
    assert out.shape == (batch, output_size)
    assert jnp.allclose(out, ref, atol=1e-2, rtol=1e-2), "mismatch vs reference"

    print("KERNEL_OK")
</pallas_src>

<mosaic_0001>
module attributes {stable_mosaic.version = 11 : i64} {
  func.func @mlp_kernel(%arg0: i32, %arg1: memref<16x32xbf16, #tpu.memory_space<vmem>>, %arg2: memref<32x128xbf16, #tpu.memory_space<vmem>>, %arg3: memref<1x128xf32, #tpu.memory_space<vmem>>, %arg4: memref<128x128xbf16, #tpu.memory_space<vmem>>, %arg5: memref<1x128xf32, #tpu.memory_space<vmem>>, %arg6: memref<128x128xbf16, #tpu.memory_space<vmem>>, %arg7: memref<1x128xf32, #tpu.memory_space<vmem>>, %arg8: memref<128x128xbf16, #tpu.memory_space<vmem>>, %arg9: memref<1x128xf32, #tpu.memory_space<vmem>>, %arg10: memref<128x128xbf16, #tpu.memory_space<vmem>>, %arg11: memref<1x128xf32, #tpu.memory_space<vmem>>, %arg12: memref<16x128xbf16, #tpu.memory_space<vmem>>) attributes {dimension_semantics = [#tpu.dimension_semantics<parallel>], iteration_bounds = array<i64: 1>, scalar_prefetch = 0 : i64, scratch_operands = 0 : i64, tpu.core_type = #tpu.core_type<tc>, window_params = [{transform_indices = @transform_0, window_bounds = array<i64: 16, 32>}, {pipeline_mode = #tpu.pipeline_mode<synchronous>, transform_indices = @transform_1, window_bounds = array<i64: 32, 128>}, {pipeline_mode = #tpu.pipeline_mode<synchronous>, transform_indices = @transform_2, window_bounds = array<i64: 1, 128>}, {pipeline_mode = #tpu.pipeline_mode<synchronous>, transform_indices = @transform_3, window_bounds = array<i64: 128, 128>}, {pipeline_mode = #tpu.pipeline_mode<synchronous>, transform_indices = @transform_4, window_bounds = array<i64: 1, 128>}, {pipeline_mode = #tpu.pipeline_mode<synchronous>, transform_indices = @transform_5, window_bounds = array<i64: 128, 128>}, {pipeline_mode = #tpu.pipeline_mode<synchronous>, transform_indices = @transform_6, window_bounds = array<i64: 1, 128>}, {pipeline_mode = #tpu.pipeline_mode<synchronous>, transform_indices = @transform_7, window_bounds = array<i64: 128, 128>}, {pipeline_mode = #tpu.pipeline_mode<synchronous>, transform_indices = @transform_8, window_bounds = array<i64: 1, 128>}, {pipeline_mode = #tpu.pipeline_mode<synchronous>, transform_indices = @transform_9, window_bounds = array<i64: 128, 128>}, {pipeline_mode = #tpu.pipeline_mode<synchronous>, transform_indices = @transform_10, window_bounds = array<i64: 1, 128>}, {transform_indices = @transform_11, window_bounds = array<i64: 16, 128>}]} {
    %c0 = arith.constant 0 : index
    %c0_0 = arith.constant 0 : index
    %0 = vector.load %arg1[%c0, %c0_0] : memref<16x32xbf16, #tpu.memory_space<vmem>>, vector<16x32xbf16>
    %c0_1 = arith.constant 0 : index
    %c0_2 = arith.constant 0 : index
    %1 = vector.load %arg2[%c0_1, %c0_2] : memref<32x128xbf16, #tpu.memory_space<vmem>>, vector<32x128xbf16>
    %cst = arith.constant dense<0.000000e+00> : vector<16x128xf32>
    %2 = tpu.matmul %0, %1, %cst {dimension_numbers = #tpu.dot_dimension_numbers<[1], [0], [0], [1], [0, 0, 1, 1], [], []>} : vector<16x32xbf16>, vector<32x128xbf16>, vector<16x128xf32> -> vector<16x128xf32>
    %c0_3 = arith.constant 0 : index
    %c0_4 = arith.constant 0 : index
    %3 = vector.load %arg3[%c0_3, %c0_4] : memref<1x128xf32, #tpu.memory_space<vmem>>, vector<1x128xf32>
    %4 = vector.broadcast %3 : vector<1x128xf32> to vector<16x128xf32>
    %5 = arith.addf %2, %4 : vector<16x128xf32>
    %cst_5 = arith.constant 0.000000e+00 : f32
    %6 = vector.broadcast %cst_5 : f32 to vector<16x128xf32>
    %7 = arith.maximumf %5, %6 : vector<16x128xf32>
    %8 = arith.truncf %7 : vector<16x128xf32> to vector<16x128xbf16>
    %c0_6 = arith.constant 0 : index
    %c0_7 = arith.constant 0 : index
    %9 = vector.load %arg4[%c0_6, %c0_7] : memref<128x128xbf16, #tpu.memory_space<vmem>>, vector<128x128xbf16>
    %cst_8 = arith.constant dense<0.000000e+00> : vector<16x128xf32>
    %10 = tpu.matmul %8, %9, %cst_8 {dimension_numbers = #tpu.dot_dimension_numbers<[1], [0], [0], [1], [0, 0, 1, 1], [], []>} : vector<16x128xbf16>, vector<128x128xbf16>, vector<16x128xf32> -> vector<16x128xf32>
    %c0_9 = arith.constant 0 : index
    %c0_10 = arith.constant 0 : index
    %11 = vector.load %arg5[%c0_9, %c0_10] : memref<1x128xf32, #tpu.memory_space<vmem>>, vector<1x128xf32>
    %12 = vector.broadcast %11 : vector<1x128xf32> to vector<16x128xf32>
    %13 = arith.addf %10, %12 : vector<16x128xf32>
    %cst_11 = arith.constant 0.000000e+00 : f32
    %14 = vector.broadcast %cst_11 : f32 to vector<16x128xf32>
    %15 = arith.maximumf %13, %14 : vector<16x128xf32>
    %16 = arith.truncf %15 : vector<16x128xf32> to vector<16x128xbf16>
    %c0_12 = arith.constant 0 : index
    %c0_13 = arith.constant 0 : index
    %17 = vector.load %arg6[%c0_12, %c0_13] : memref<128x128xbf16, #tpu.memory_space<vmem>>, vector<128x128xbf16>
    %cst_14 = arith.constant dense<0.000000e+00> : vector<16x128xf32>
    %18 = tpu.matmul %16, %17, %cst_14 {dimension_numbers = #tpu.dot_dimension_numbers<[1], [0], [0], [1], [0, 0, 1, 1], [], []>} : vector<16x128xbf16>, vector<128x128xbf16>, vector<16x128xf32> -> vector<16x128xf32>
    %c0_15 = arith.constant 0 : index
    %c0_16 = arith.constant 0 : index
    %19 = vector.load %arg7[%c0_15, %c0_16] : memref<1x128xf32, #tpu.memory_space<vmem>>, vector<1x128xf32>
    %20 = vector.broadcast %19 : vector<1x128xf32> to vector<16x128xf32>
    %21 = arith.addf %18, %20 : vector<16x128xf32>
    %cst_17 = arith.constant 0.000000e+00 : f32
    %22 = vector.broadcast %cst_17 : f32 to vector<16x128xf32>
    %23 = arith.maximumf %21, %22 : vector<16x128xf32>
    %24 = arith.truncf %23 : vector<16x128xf32> to vector<16x128xbf16>
    %c0_18 = arith.constant 0 : index
    %c0_19 = arith.constant 0 : index
    %25 = vector.load %arg8[%c0_18, %c0_19] : memref<128x128xbf16, #tpu.memory_space<vmem>>, vector<128x128xbf16>
    %cst_20 = arith.constant dense<0.000000e+00> : vector<16x128xf32>
    %26 = tpu.matmul %24, %25, %cst_20 {dimension_numbers = #tpu.dot_dimension_numbers<[1], [0], [0], [1], [0, 0, 1, 1], [], []>} : vector<16x128xbf16>, vector<128x128xbf16>, vector<16x128xf32> -> vector<16x128xf32>
    %c0_21 = arith.constant 0 : index
    %c0_22 = arith.constant 0 : index
    %27 = vector.load %arg9[%c0_21, %c0_22] : memref<1x128xf32, #tpu.memory_space<vmem>>, vector<1x128xf32>
    %28 = vector.broadcast %27 : vector<1x128xf32> to vector<16x128xf32>
    %29 = arith.addf %26, %28 : vector<16x128xf32>
    %cst_23 = arith.constant 0.000000e+00 : f32
    %30 = vector.broadcast %cst_23 : f32 to vector<16x128xf32>
    %31 = arith.maximumf %29, %30 : vector<16x128xf32>
    %32 = arith.truncf %31 : vector<16x128xf32> to vector<16x128xbf16>
    %c0_24 = arith.constant 0 : index
    %c0_25 = arith.constant 0 : index
    %33 = vector.load %arg10[%c0_24, %c0_25] : memref<128x128xbf16, #tpu.memory_space<vmem>>, vector<128x128xbf16>
    %cst_26 = arith.constant dense<0.000000e+00> : vector<16x128xf32>
    %34 = tpu.matmul %32, %33, %cst_26 {dimension_numbers = #tpu.dot_dimension_numbers<[1], [0], [0], [1], [0, 0, 1, 1], [], []>} : vector<16x128xbf16>, vector<128x128xbf16>, vector<16x128xf32> -> vector<16x128xf32>
    %c0_27 = arith.constant 0 : index
    %c0_28 = arith.constant 0 : index
    %35 = vector.load %arg11[%c0_27, %c0_28] : memref<1x128xf32, #tpu.memory_space<vmem>>, vector<1x128xf32>
    %36 = vector.broadcast %35 : vector<1x128xf32> to vector<16x128xf32>
    %37 = arith.addf %34, %36 : vector<16x128xf32>
    %38 = arith.truncf %37 : vector<16x128xf32> to vector<16x128xbf16>
    %c0_29 = arith.constant 0 : index
    %c0_30 = arith.constant 0 : index
    %39 = vector.load %arg12[%c0_29, %c0_30] : memref<16x128xbf16, #tpu.memory_space<vmem>>, vector<16x128xbf16>
    tpu.vector_store %arg12[%c0_29, %c0_30], %38 {strides = array<i32>} : memref<16x128xbf16, #tpu.memory_space<vmem>>, vector<16x128xbf16>,
    return
  }
  func.func @transform_0(%arg0: i32) -> (i32, i32) {
    %c0_i32 = arith.constant 0 : i32
    %c0_i32_0 = arith.constant 0 : i32
    return %arg0, %c0_i32 : i32, i32
  }
  func.func @transform_1(%arg0: i32) -> (i32, i32) {
    %c0_i32 = arith.constant 0 : i32
    %c0_i32_0 = arith.constant 0 : i32
    %c0_i32_1 = arith.constant 0 : i32
    return %c0_i32, %c0_i32_0 : i32, i32
  }
  func.func @transform_2(%arg0: i32) -> (i32, i32) {
    %c0_i32 = arith.constant 0 : i32
    %c0_i32_0 = arith.constant 0 : i32
    %c0_i32_1 = arith.constant 0 : i32
    return %c0_i32, %c0_i32_0 : i32, i32
  }
  func.func @transform_3(%arg0: i32) -> (i32, i32) {
    %c0_i32 = arith.constant 0 : i32
    %c0_i32_0 = arith.constant 0 : i32
    %c0_i32_1 = arith.constant 0 : i32
    return %c0_i32, %c0_i32_0 : i32, i32
  }
  func.func @transform_4(%arg0: i32) -> (i32, i32) {
    %c0_i32 = arith.constant 0 : i32
    %c0_i32_0 = arith.constant 0 : i32
    %c0_i32_1 = arith.constant 0 : i32
    return %c0_i32, %c0_i32_0 : i32, i32
  }
  func.func @transform_5(%arg0: i32) -> (i32, i32) {
    %c0_i32 = arith.constant 0 : i32
    %c0_i32_0 = arith.constant 0 : i32
    %c0_i32_1 = arith.constant 0 : i32
    return %c0_i32, %c0_i32_0 : i32, i32
  }
  func.func @transform_6(%arg0: i32) -> (i32, i32) {
    %c0_i32 = arith.constant 0 : i32
    %c0_i32_0 = arith.constant 0 : i32
    %c0_i32_1 = arith.constant 0 : i32
    return %c0_i32, %c0_i32_0 : i32, i32
  }
  func.func @transform_7(%arg0: i32) -> (i32, i32) {
    %c0_i32 = arith.constant 0 : i32
    %c0_i32_0 = arith.constant 0 : i32
    %c0_i32_1 = arith.constant 0 : i32
    return %c0_i32, %c0_i32_0 : i32, i32
  }
  func.func @transform_8(%arg0: i32) -> (i32, i32) {
    %c0_i32 = arith.constant 0 : i32
    %c0_i32_0 = arith.constant 0 : i32
    %c0_i32_1 = arith.constant 0 : i32
    return %c0_i32, %c0_i32_0 : i32, i32
  }
  func.func @transform_9(%arg0: i32) -> (i32, i32) {
    %c0_i32 = arith.constant 0 : i32
    %c0_i32_0 = arith.constant 0 : i32
    %c0_i32_1 = arith.constant 0 : i32
    return %c0_i32, %c0_i32_0 : i32, i32
  }
  func.func @transform_10(%arg0: i32) -> (i32, i32) {
    %c0_i32 = arith.constant 0 : i32
    %c0_i32_0 = arith.constant 0 : i32
    %c0_i32_1 = arith.constant 0 : i32
    return %c0_i32, %c0_i32_0 : i32, i32
  }
  func.func @transform_11(%arg0: i32) -> (i32, i32) {
    %c0_i32 = arith.constant 0 : i32
    %c0_i32_0 = arith.constant 0 : i32
    return %arg0, %c0_i32 : i32, i32
  }
}

</mosaic_0001>

<llo_original>
// kernel: mlp_forward.1
$region0: #{mlp_forward.1}
  #allocation0 [shape = 'u32[]', space=smem, size = 0x4, offset = 0x4, fixed_abs, tag = 'smem constant byte address 0x4 - core index']
  #allocation1 [shape = 'u32[72,128]{1,0:T(1,128)}', space=vmem, size = 0x9000, scoped, tag = 'internal scratch']
  %s0 = inlined_call_operand.vmem [shape: bf16[16,32], index: 0, kind: input, shape index: {}]
  %s1 = inlined_call_operand.vmem [shape: bf16[32,128], index: 1, kind: input, shape index: {}]
  %s2 = inlined_call_operand.vmem [shape: f32[1,128], index: 2, kind: input, shape index: {}]
  %s3 = inlined_call_operand.hbm [shape: bf16[128,128], index: 3, kind: input, shape index: {}]
  %s4 = inlined_call_operand.vmem [shape: f32[1,128], index: 4, kind: input, shape index: {}]
  %s5 = inlined_call_operand.hbm [shape: bf16[128,128], index: 5, kind: input, shape index: {}]
  %s6 = inlined_call_operand.vmem [shape: f32[1,128], index: 6, kind: input, shape index: {}]
  %s7 = inlined_call_operand.hbm [shape: bf16[128,128], index: 7, kind: input, shape index: {}]
  %s8 = inlined_call_operand.vmem [shape: f32[1,128], index: 8, kind: input, shape index: {}]
  %s9 = inlined_call_operand.hbm [shape: bf16[128,128], index: 9, kind: input, shape index: {}]
  %s10 = inlined_call_operand.vmem [shape: f32[1,128], index: 10, kind: input, shape index: {}]
  %s11 = inlined_call_operand.vmem [shape: bf16[16,128], index: 11, kind: output, shape index: {}]
  %s12 = sld [smem:[#allocation0]]
  $region70: #{mlp_forward.1} parent=0
    _
  %s14 = ssub.s32 1, %s12
  %s15 = scalar_select 0, %s14, %s12
  $region1: #{mlp_forward.1} parent=0
    #allocation2 [shape = 'u8[32768]{0}', space=vmem, size = 0x8000, scoped, tag = 'input window, operand 3, single buffered']
    #allocation3 [shape = 's32[1]{0}', space=sflag, size = 0x4, scoped, tag = 'scoped memory for mlp_forward.1']
    #allocation4 [shape = 'u8[32768]{0}', space=vmem, size = 0x8000, scoped, tag = 'input window, operand 5, single buffered']
    #allocation5 [shape = 's32[1]{0}', space=sflag, size = 0x4, scoped, tag = 'scoped memory for mlp_forward.1']
    #allocation6 [shape = 'u8[32768]{0}', space=vmem, size = 0x8000, scoped, tag = 'input window, operand 7, single buffered']
    #allocation7 [shape = 'u8[32768]{0}', space=vmem, size = 0x8000, scoped, tag = 'input window, operand 9, single buffered']
    #allocation8 [shape = 's32[1]{0}', space=sflag, size = 0x4, scoped, tag = 'scoped memory for mlp_forward.1']
    %16 = vsyncpa [#allocation3], 0
    %17 = vsyncpa [#allocation5], 0
    %18 = vsyncpa [#allocation8], 0
    // Predicated region
    $region2: #{mlp_forward.1} parent=1 // pred_check
      _
    $region3: #{mlp_forward.1} parent=1 // pred_check_branch
      %20 = sbr.rel (0) target = $region5
    $region4: #{mlp_forward.1} parent=1 // pred_region
      _
    $region5: #{mlp_forward.1} parent=1 // pred_fallthru
      _
    // Predicated region
    $region6: #{mlp_forward.1} parent=1 // pred_check
      _
    $region7: #{mlp_forward.1} parent=1 // pred_check_branch
      %22 = sbr.rel (0) target = $region9
    $region8: #{mlp_forward.1} parent=1 // pred_region
      _
    $region9: #{mlp_forward.1} parent=1 // pred_fallthru
      _
    // Predicated region
    $region10: #{mlp_forward.1} parent=1 // pred_check
      _
    $region11: #{mlp_forward.1} parent=1 // pred_check_branch
      %24 = sbr.rel (0) target = $region13
    $region12: #{mlp_forward.1} parent=1 // pred_region
      _
    $region13: #{mlp_forward.1} parent=1 // pred_fallthru
      _
    // Predicated region
    $region14: #{mlp_forward.1} parent=1 // pred_check
      _
    $region15: #{mlp_forward.1} parent=1 // pred_check_branch
      %26 = sbr.rel (0) target = $region17
    $region16: #{mlp_forward.1} parent=1 // pred_region
      %28 = vsyncadd [#allocation3], 0
      %s29 = sshll.u32 %s3, 4
      %s30 = int_to_ptr.hbm [resolvable:$true] %s29
      %s31 = sshll.u32 [#allocation2], 4
      %s32 = int_to_ptr.vmem [resolvable:$true] %s31
      %37 = dma.hbm_to_vmem [thread:$0]  %s30, 1024, %s32, [#allocation3], 64, 64, 4
    $region17: #{mlp_forward.1} parent=1 // pred_fallthru
      _
    // Predicated region
    $region18: #{mlp_forward.1} parent=1 // pred_check
      _
    $region19: #{mlp_forward.1} parent=1 // pred_check_branch
      %39 = sbr.rel (0) target = $region21
    $region20: #{mlp_forward.1} parent=1 // pred_region
      _
    $region21: #{mlp_forward.1} parent=1 // pred_fallthru
      _
    // Predicated region
    $region22: #{mlp_forward.1} parent=1 // pred_check
      _
    $region23: #{mlp_forward.1} parent=1 // pred_check_branch
      %41 = sbr.rel (0) target = $region25
    $region24: #{mlp_forward.1} parent=1 // pred_region
      %43 = vsyncadd [#allocation5], 0
      %s44 = sshll.u32 %s5, 4
      %s45 = int_to_ptr.hbm [resolvable:$true] %s44
      %s46 = sshll.u32 [#allocation4], 4
      %s47 = int_to_ptr.vmem [resolvable:$true] %s46
      %52 = dma.hbm_to_vmem [thread:$0]  %s45, 1024, %s47, [#allocation5], 64, 64, 4
    $region25: #{mlp_forward.1} parent=1 // pred_fallthru
      _
    // Predicated region
    $region26: #{mlp_forward.1} parent=1 // pred_check
      _
    $region27: #{mlp_forward.1} parent=1 // pred_check_branch
      %54 = sbr.rel (0) target = $region29
    $region28: #{mlp_forward.1} parent=1 // pred_region
      _
    $region29: #{mlp_forward.1} parent=1 // pred_fallthru
      _
    // Predicated region
    $region30: #{mlp_forward.1} parent=1 // pred_check
      _
    $region31: #{mlp_forward.1} parent=1 // pred_check_branch
      %56 = sbr.rel (0) target = $region33
    $region32: #{mlp_forward.1} parent=1 // pred_region
      %58 = vsyncadd [#allocation5], 0
      %s59 = sshll.u32 %s7, 4
      %s60 = int_to_ptr.hbm [resolvable:$true] %s59
      %s61 = sshll.u32 [#allocation6], 4
      %s62 = int_to_ptr.vmem [resolvable:$true] %s61
      %67 = dma.hbm_to_vmem [thread:$0]  %s60, 1024, %s62, [#allocation5], 64, 64, 4
    $region33: #{mlp_forward.1} parent=1 // pred_fallthru
      _
    // Predicated region
    $region34: #{mlp_forward.1} parent=1 // pred_check
      _
    $region35: #{mlp_forward.1} parent=1 // pred_check_branch
      %69 = sbr.rel (0) target = $region37
    $region36: #{mlp_forward.1} parent=1 // pred_region
      _
    $region37: #{mlp_forward.1} parent=1 // pred_fallthru
      _
    // Predicated region
    $region38: #{mlp_forward.1} parent=1 // pred_check
      _
    $region39: #{mlp_forward.1} parent=1 // pred_check_branch
      %71 = sbr.rel (0) target = $region41
    $region40: #{mlp_forward.1} parent=1 // pred_region
      %73 = vsyncadd [#allocation8], 0
      %s74 = sshll.u32 %s9, 4
      %s75 = int_to_ptr.hbm [resolvable:$true] %s74
      %s76 = sshll.u32 [#allocation7], 4
      %s77 = int_to_ptr.vmem [resolvable:$true] %s76
      %82 = dma.hbm_to_vmem [thread:$0]  %s75, 1024, %s77, [#allocation8], 64, 64, 4
    $region41: #{mlp_forward.1} parent=1 // pred_fallthru
      _
    // Predicated region
    $region42: #{mlp_forward.1} parent=1 // pred_check
      _
    $region43: #{mlp_forward.1} parent=1 // pred_check_branch
      %84 = sbr.rel (0) target = $region45
    $region44: #{mlp_forward.1} parent=1 // pred_region
      _
    $region45: #{mlp_forward.1} parent=1 // pred_fallthru
      _
    // Predicated region
    $region46: #{mlp_forward.1} parent=1 // pred_check
      _
    $region47: #{mlp_forward.1} parent=1 // pred_check_branch
      %86 = sbr.rel (0) target = $region49
    $region48: #{mlp_forward.1} parent=1 // pred_region
      %88 = dma.done [#allocation3], 1024
    $region49: #{mlp_forward.1} parent=1 // pred_fallthru
      _
    // Predicated region
    $region50: #{mlp_forward.1} parent=1 // pred_check
      _
    $region51: #{mlp_forward.1} parent=1 // pred_check_branch
      %90 = sbr.rel (0) target = $region53
    $region52: #{mlp_forward.1} parent=1 // pred_region
      %92 = dma.done [#allocation5], 1024
    $region53: #{mlp_forward.1} parent=1 // pred_fallthru
      _
    // Predicated region
    $region54: #{mlp_forward.1} parent=1 // pred_check
      _
    $region55: #{mlp_forward.1} parent=1 // pred_check_branch
      %94 = sbr.rel (0) target = $region57
    $region56: #{mlp_forward.1} parent=1 // pred_region
      %96 = dma.done [#allocation5], 1024
    $region57: #{mlp_forward.1} parent=1 // pred_fallthru
      _
    // Predicated region
    $region58: #{mlp_forward.1} parent=1 // pred_check
      _
    $region59: #{mlp_forward.1} parent=1 // pred_check_branch
      %98 = sbr.rel (0) target = $region61
    $region60: #{mlp_forward.1} parent=1 // pred_region
      %100 = dma.done [#allocation8], 1024
    $region61: #{mlp_forward.1} parent=1 // pred_fallthru
      _
    %v102 = vld [vmem:[%s0] sm:$0xf]
    %v103 = vld [vmem:[%s0 + $0x4] sm:$0xf]
    %v104 = vld [vmem:[%s1] sm:$0xf]
    %v105 = vld [vmem:[%s1 + $0x4] sm:$0xf]
    %v106 = vld [vmem:[%s1 + $0x8] sm:$0xf]
    %v107 = vld [vmem:[%s1 + $0xc] sm:$0xf]
    %v108 = vld [vmem:[%s2] sm:$0x1]
    %v110 = vperm.slane %v108, 0
    %v114 = vunpack.c.l.b16 %v102
    %v115 = vunpack.c.l.b16 %v103
    %v116 = vpack.c.b16 %v115, %v114
    %v121 = vunpack.c.l.b16 %v104
    %v122 = vunpack.c.l.b16 %v105
    %v123 = vunpack.c.l.b16 %v106
    %v124 = vunpack.c.l.b16 %v107
    %v125 = vpack.c.b16 %v122, %v121
    %v126 = vpack.c.b16 %v124, %v123
    %vm129 = vcmask 261120
    %v131 = vsel %vm129, %v116, 0
    %133 = vmatpush.bf16.msra.mxu0 0
    %134 = vmatpush.bf16.msra.mxu0 0
    %135 = vmatpush.bf16.msra.mxu0 0
    %136 = vmatpush.bf16.msra.mxu0 0
    %137 = vmatpush.bf16.msra.mxu0 0
    %138 = vmatpush.bf16.msra.mxu0 0
    %139 = vmatpush.bf16.msra.mxu0 %v126
    %140 = vmatpush.bf16.msra.mxu0 %v125
    %141 = vmatmul.bf16.gmra.mxu0 %v131
    %v142 = vpop.f32.mrf.mxu0
    %v143 = vadd.f32 %v110, %v142
    %v144 = vpop.f32.mrf.mxu0
    %v145 = vadd.f32 %v110, %v144
    %146 = vdwg.mxu0
    %v147 = vmax.f32 %v143, 0.0
    %v148 = vmax.f32 %v145, 0.0
    %v149 = vpack.c.bf16 %v148, %v147
    %v150 = vld [vmem:[#allocation2] sm:$0xf]
    %v151 = vld [vmem:[#allocation2 + $0x4] sm:$0xf]
    %v152 = vld [vmem:[#allocation2 + $0x8] sm:$0xf]
    %v153 = vld [vmem:[#allocation2 + $0xc] sm:$0xf]
    %v154 = vld [vmem:[#allocation2 + $0x10] sm:$0xf]
    %v155 = vld [vmem:[#allocation2 + $0x14] sm:$0xf]
    %v156 = vld [vmem:[#allocation2 + $0x18] sm:$0xf]
    %v157 = vld [vmem:[#allocation2 + $0x1c] sm:$0xf]
    %v158 = vld [vmem:[#allocation2 + $0x20] sm:$0xf]
    %v159 = vld [vmem:[#allocation2 + $0x24] sm:$0xf]
    %v160 = vld [vmem:[#allocation2 + $0x28] sm:$0xf]
    %v161 = vld [vmem:[#allocation2 + $0x2c] sm:$0xf]
    %v162 = vld [vmem:[#allocation2 + $0x30] sm:$0xf]
    %v163 = vld [vmem:[#allocation2 + $0x34] sm:$0xf]
    %v164 = vld [vmem:[#allocation2 + $0x38] sm:$0xf]
    %v165 = vld [vmem:[#allocation2 + $0x3c] sm:$0xf]
    %v166 = vld [vmem:[%s4] sm:$0x1]
    %v168 = vperm.slane %v166, 0
    %v186 = vunpack.c.l.b16 %v150
    %v187 = vunpack.c.l.b16 %v151
    %v188 = vunpack.c.l.b16 %v152
    %v189 = vunpack.c.l.b16 %v153
    %v190 = vunpack.c.l.b16 %v154
    %v191 = vunpack.c.l.b16 %v155
    %v192 = vunpack.c.l.b16 %v156
    %v193 = vunpack.c.l.b16 %v157
    %v194 = vunpack.c.l.b16 %v158
    %v195 = vunpack.c.l.b16 %v159
    %v196 = vunpack.c.l.b16 %v160
    %v197 = vunpack.c.l.b16 %v161
    %v198 = vunpack.c.l.b16 %v162
    %v199 = vunpack.c.l.b16 %v163
    %v200 = vunpack.c.l.b16 %v164
    %v201 = vunpack.c.l.b16 %v165
    %v202 = vpack.c.b16 %v187, %v186
    %v203 = vpack.c.b16 %v189, %v188
    %v204 = vpack.c.b16 %v191, %v190
    %v205 = vpack.c.b16 %v193, %v192
    %v206 = vpack.c.b16 %v195, %v194
    %v207 = vpack.c.b16 %v197, %v196
    %v208 = vpack.c.b16 %v199, %v198
    %v209 = vpack.c.b16 %v201, %v200
    %218 = vmatpush.bf16.msra.mxu0 %v209
    %219 = vmatpush.bf16.msra.mxu0 %v208
    %220 = vmatpush.bf16.msra.mxu0 %v207
    %221 = vmatpush.bf16.msra.mxu0 %v206
    %222 = vmatpush.bf16.msra.mxu0 %v205
    %223 = vmatpush.bf16.msra.mxu0 %v204
    %224 = vmatpush.bf16.msra.mxu0 %v203
    %225 = vmatpush.bf16.msra.mxu0 %v202
    %226 = vmatmul.bf16.gmra.mxu0 %v149
    %v227 = vpop.f32.mrf.mxu0
    %v228 = vadd.f32 %v168, %v227
    %v229 = vpop.f32.mrf.mxu0
    %v230 = vadd.f32 %v168, %v229
    %231 = vdwg.mxu0
    %v232 = vmax.f32 %v228, 0.0
    %v233 = vmax.f32 %v230, 0.0
    %v234 = vpack.c.bf16 %v233, %v232
    %v235 = vld [vmem:[#allocation4] sm:$0xf]
    %v236 = vld [vmem:[#allocation4 + $0x4] sm:$0xf]
    %v237 = vld [vmem:[#allocation4 + $0x8] sm:$0xf]
    %v238 = vld [vmem:[#allocation4 + $0xc] sm:$0xf]
    %v239 = vld [vmem:[#allocation4 + $0x10] sm:$0xf]
    %v240 = vld [vmem:[#allocation4 + $0x14] sm:$0xf]
    %v241 = vld [vmem:[#allocation4 + $0x18] sm:$0xf]
    %v242 = vld [vmem:[#allocation4 + $0x1c] sm:$0xf]
    %v243 = vld [vmem:[#allocation4 + $0x20] sm:$0xf]
    %v244 = vld [vmem:[#allocation4 + $0x24] sm:$0xf]
    %v245 = vld [vmem:[#allocation4 + $0x28] sm:$0xf]
    %v246 = vld [vmem:[#allocation4 + $0x2c] sm:$0xf]
    %v247 = vld [vmem:[#allocation4 + $0x30] sm:$0xf]
    %v248 = vld [vmem:[#allocation4 + $0x34] sm:$0xf]
    %v249 = vld [vmem:[#allocation4 + $0x38] sm:$0xf]
    %v250 = vld [vmem:[#allocation4 + $0x3c] sm:$0xf]
    %v251 = vld [vmem:[%s6] sm:$0x1]
    %v253 = vperm.slane %v251, 0
    %v271 = vunpack.c.l.b16 %v235
    %v272 = vunpack.c.l.b16 %v236
    %v273 = vunpack.c.l.b16 %v237
    %v274 = vunpack.c.l.b16 %v238
    %v275 = vunpack.c.l.b16 %v239
    %v276 = vunpack.c.l.b16 %v240
    %v277 = vunpack.c.l.b16 %v241
    %v278 = vunpack.c.l.b16 %v242
    %v279 = vunpack.c.l.b16 %v243
    %v280 = vunpack.c.l.b16 %v244
    %v281 = vunpack.c.l.b16 %v245
    %v282 = vunpack.c.l.b16 %v246
    %v283 = vunpack.c.l.b16 %v247
    %v284 = vunpack.c.l.b16 %v248
    %v285 = vunpack.c.l.b16 %v249
    %v286 = vunpack.c.l.b16 %v250
    %v287 = vpack.c.b16 %v272, %v271
    %v288 = vpack.c.b16 %v274, %v273
    %v289 = vpack.c.b16 %v276, %v275
    %v290 = vpack.c.b16 %v278, %v277
    %v291 = vpack.c.b16 %v280, %v279
    %v292 = vpack.c.b16 %v282, %v281
    %v293 = vpack.c.b16 %v284, %v283
    %v294 = vpack.c.b16 %v286, %v285
    %303 = vmatpush.bf16.msra.mxu0 %v294
    %304 = vmatpush.bf16.msra.mxu0 %v293
    %305 = vmatpush.bf16.msra.mxu0 %v292
    %306 = vmatpush.bf16.msra.mxu0 %v291
    %307 = vmatpush.bf16.msra.mxu0 %v290
    %308 = vmatpush.bf16.msra.mxu0 %v289
    %309 = vmatpush.bf16.msra.mxu0 %v288
    %310 = vmatpush.bf16.msra.mxu0 %v287
    %311 = vmatmul.bf16.gmra.mxu0 %v234
    %v312 = vpop.f32.mrf.mxu0
    %v313 = vadd.f32 %v253, %v312
    %v314 = vpop.f32.mrf.mxu0
    %v315 = vadd.f32 %v253, %v314
    %316 = vdwg.mxu0
    %v317 = vmax.f32 %v313, 0.0
    %v318 = vmax.f32 %v315, 0.0
    %v319 = vpack.c.bf16 %v318, %v317
    %v320 = vld [vmem:[#allocation6] sm:$0xf]
    %v321 = vld [vmem:[#allocation6 + $0x4] sm:$0xf]
    %v322 = vld [vmem:[#allocation6 + $0x8] sm:$0xf]
    %v323 = vld [vmem:[#allocation6 + $0xc] sm:$0xf]
    %v324 = vld [vmem:[#allocation6 + $0x10] sm:$0xf]
    %v325 = vld [vmem:[#allocation6 + $0x14] sm:$0xf]
    %v326 = vld [vmem:[#allocation6 + $0x18] sm:$0xf]
    %v327 = vld [vmem:[#allocation6 + $0x1c] sm:$0xf]
    %v328 = vld [vmem:[#allocation6 + $0x20] sm:$0xf]
    %v329 = vld [vmem:[#allocation6 + $0x24] sm:$0xf]
    %v330 = vld [vmem:[#allocation6 + $0x28] sm:$0xf]
    %v331 = vld [vmem:[#allocation6 + $0x2c] sm:$0xf]
    %v332 = vld [vmem:[#allocation6 + $0x30] sm:$0xf]
    %v333 = vld [vmem:[#allocation6 + $0x34] sm:$0xf]
    %v334 = vld [vmem:[#allocation6 + $0x38] sm:$0xf]
    %v335 = vld [vmem:[#allocation6 + $0x3c] sm:$0xf]
    %v336 = vld [vmem:[%s8] sm:$0x1]
    %v338 = vperm.slane %v336, 0
    %v356 = vunpack.c.l.b16 %v320
    %v357 = vunpack.c.l.b16 %v321
    %v358 = vunpack.c.l.b16 %v322
    %v359 = vunpack.c.l.b16 %v323
    %v360 = vunpack.c.l.b16 %v324
    %v361 = vunpack.c.l.b16 %v325
    %v362 = vunpack.c.l.b16 %v326
    %v363 = vunpack.c.l.b16 %v327
    %v364 = vunpack.c.l.b16 %v328
    %v365 = vunpack.c.l.b16 %v329
    %v366 = vunpack.c.l.b16 %v330
    %v367 = vunpack.c.l.b16 %v331
    %v368 = vunpack.c.l.b16 %v332
    %v369 = vunpack.c.l.b16 %v333
    %v370 = vunpack.c.l.b16 %v334
    %v371 = vunpack.c.l.b16 %v335
    %v372 = vpack.c.b16 %v357, %v356
    %v373 = vpack.c.b16 %v359, %v358
    %v374 = vpack.c.b16 %v361, %v360
    %v375 = vpack.c.b16 %v363, %v362
    %v376 = vpack.c.b16 %v365, %v364
    %v377 = vpack.c.b16 %v367, %v366
    %v378 = vpack.c.b16 %v369, %v368
    %v379 = vpack.c.b16 %v371, %v370
    %388 = vmatpush.bf16.msra.mxu0 %v379
    %389 = vmatpush.bf16.msra.mxu0 %v378
    %390 = vmatpush.bf16.msra.mxu0 %v377
    %391 = vmatpush.bf16.msra.mxu0 %v376
    %392 = vmatpush.bf16.msra.mxu0 %v375
    %393 = vmatpush.bf16.msra.mxu0 %v374
    %394 = vmatpush.bf16.msra.mxu0 %v373
    %395 = vmatpush.bf16.msra.mxu0 %v372
    %396 = vmatmul.bf16.gmra.mxu0 %v319
    %v397 = vpop.f32.mrf.mxu0
    %v398 = vadd.f32 %v338, %v397
    %v399 = vpop.f32.mrf.mxu0
    %v400 = vadd.f32 %v338, %v399
    %401 = vdwg.mxu0
    %v402 = vmax.f32 %v398, 0.0
    %v403 = vmax.f32 %v400, 0.0
    %v404 = vpack.c.bf16 %v403, %v402
    %v405 = vld [vmem:[#allocation7] sm:$0xf]
    %v406 = vld [vmem:[#allocation7 + $0x4] sm:$0xf]
    %v407 = vld [vmem:[#allocation7 + $0x8] sm:$0xf]
    %v408 = vld [vmem:[#allocation7 + $0xc] sm:$0xf]
    %v409 = vld [vmem:[#allocation7 + $0x10] sm:$0xf]
    %v410 = vld [vmem:[#allocation7 + $0x14] sm:$0xf]
    %v411 = vld [vmem:[#allocation7 + $0x18] sm:$0xf]
    %v412 = vld [vmem:[#allocation7 + $0x1c] sm:$0xf]
    %v413 = vld [vmem:[#allocation7 + $0x20] sm:$0xf]
    %v414 = vld [vmem:[#allocation7 + $0x24] sm:$0xf]
    %v415 = vld [vmem:[#allocation7 + $0x28] sm:$0xf]
    %v416 = vld [vmem:[#allocation7 + $0x2c] sm:$0xf]
    %v417 = vld [vmem:[#allocation7 + $0x30] sm:$0xf]
    %v418 = vld [vmem:[#allocation7 + $0x34] sm:$0xf]
    %v419 = vld [vmem:[#allocation7 + $0x38] sm:$0xf]
    %v420 = vld [vmem:[#allocation7 + $0x3c] sm:$0xf]
    %v421 = vld [vmem:[%s10] sm:$0x1]
    %v423 = vperm.slane %v421, 0
    %v441 = vunpack.c.l.b16 %v405
    %v442 = vunpack.c.l.b16 %v406
    %v443 = vunpack.c.l.b16 %v407
    %v444 = vunpack.c.l.b16 %v408
    %v445 = vunpack.c.l.b16 %v409
    %v446 = vunpack.c.l.b16 %v410
    %v447 = vunpack.c.l.b16 %v411
    %v448 = vunpack.c.l.b16 %v412
    %v449 = vunpack.c.l.b16 %v413
    %v450 = vunpack.c.l.b16 %v414
    %v451 = vunpack.c.l.b16 %v415
    %v452 = vunpack.c.l.b16 %v416
    %v453 = vunpack.c.l.b16 %v417
    %v454 = vunpack.c.l.b16 %v418
    %v455 = vunpack.c.l.b16 %v419
    %v456 = vunpack.c.l.b16 %v420
    %v457 = vpack.c.b16 %v442, %v441
    %v458 = vpack.c.b16 %v444, %v443
    %v459 = vpack.c.b16 %v446, %v445
    %v460 = vpack.c.b16 %v448, %v447
    %v461 = vpack.c.b16 %v450, %v449
    %v462 = vpack.c.b16 %v452, %v451
    %v463 = vpack.c.b16 %v454, %v453
    %v464 = vpack.c.b16 %v456, %v455
    %473 = vmatpush.bf16.msra.mxu0 %v464
    %474 = vmatpush.bf16.msra.mxu0 %v463
    %475 = vmatpush.bf16.msra.mxu0 %v462
    %476 = vmatpush.bf16.msra.mxu0 %v461
    %477 = vmatpush.bf16.msra.mxu0 %v460
    %478 = vmatpush.bf16.msra.mxu0 %v459
    %479 = vmatpush.bf16.msra.mxu0 %v458
    %480 = vmatpush.bf16.msra.mxu0 %v457
    %481 = vmatmul.bf16.gmra.mxu0 %v404
    %v482 = vpop.f32.mrf.mxu0
    %v483 = vadd.f32 %v423, %v482
    %v484 = vpop.f32.mrf.mxu0
    %v485 = vadd.f32 %v423, %v484
    %486 = vdwg.mxu0
    %v487 = vpack.c.bf16 %v483, %v483
    %v488 = vpack.c.bf16 %v485, %v485
    %489 = vst [vmem:[%s11] sm:$0xf] %v487
    %490 = vst [vmem:[%s11 + $0x4] sm:$0xf] %v488
    // Predicated region
    $region62: #{mlp_forward.1} parent=1 // pred_check
      _
    $region63: #{mlp_forward.1} parent=1 // pred_check_branch
      %492 = sbr.rel (0) target = $region65
    $region64: #{mlp_forward.1} parent=1 // pred_region
      _
    $region65: #{mlp_forward.1} parent=1 // pred_fallthru
      _
    // Predicated region
    $region66: #{mlp_forward.1} parent=1 // pred_check
      _
    $region67: #{mlp_forward.1} parent=1 // pred_check_branch
      %494 = sbr.rel (0) target = $region69
    $region68: #{mlp_forward.1} parent=1 // pred_region
      _
    $region69: #{mlp_forward.1} parent=1 // pred_fallthru
      _
    %495 = vsyncpa [#allocation3], 1
    %496 = vsyncpa [#allocation5], 1
    %497 = vsyncpa [#allocation8], 1

</llo_original>
